<compile_context>
chip_gen: v5e
topology: v5e:2x2
jax: 0.10.0
libtpu: 0.0.40
codegen_flags: <defaults>
</compile_context>

<pallas_src>
import jax
import jax.numpy as jnp
from jax import lax
from jax.experimental import pallas as pl
from jax.experimental.pallas import tpu as pltpu


def _round_up(n, m):
    return ((n + m - 1) // m) * m


# ----------------------------------------------------------------------------
# Fused kernel: per row-tile  h = relu((A_hat_tile @ X) @ W1 + b1)
#               accumulate    acc += PA[:, tile] @ h        (via PA^T row tile)
#               finalize      out = acc @ WF + bF
# ----------------------------------------------------------------------------
def gcn_fused_kernel(ahat_ref, pat_ref, x_ref, w1_ref, b1_ref, wf_ref, bf_ref,
                     out_ref, acc_ref):
    i = pl.program_id(0)

    @pl.when(i == 0)
    def _():
        acc_ref[...] = jnp.zeros_like(acc_ref)

    # layer-1 for this row tile (dominant N^2 matmul runs at bf16 MXU rate, f32 accum)
    ax = jnp.dot(ahat_ref[...], x_ref[...], preferred_element_type=jnp.float32)
    h = jnp.dot(ax, w1_ref[...], preferred_element_type=jnp.float32) + b1_ref[...]
    h = jnp.maximum(h, 0.0)

    # fused (conv2-aggregation + mean-pool): acc[B,Hp] += PA^T_tile[tm,B]^T @ h[tm,Hp]
    acc_ref[...] += lax.dot_general(
        pat_ref[...], h,
        dimension_numbers=(((0,), (0,)), ((), ())),
        preferred_element_type=jnp.float32)

    @pl.when(i == pl.num_programs(0) - 1)
    def _():
        out_ref[...] = (jnp.dot(acc_ref[...], wf_ref[...],
                                preferred_element_type=jnp.float32)
                        + bf_ref[...])


# ----------------------------------------------------------------------------
# Wrapper: graph-structure / parameter precompute (hoistable across calls), padding,
#          and the single pallas_call.
# ----------------------------------------------------------------------------
def gcn_forward(params, x, edge_index, batch, num_graphs, *, tm=512):
    if x.ndim == 1:
        x = x[:, None]
    x = x.astype(jnp.float32)
    N, F = x.shape
    src, tgt = edge_index[0], edge_index[1]

    # ---- A_hat = D^{-1/2}(A+I)D^{-1/2}  (built once; cacheable when graph is static)
    adj = (jnp.zeros((N, N), jnp.float32).at[tgt, src].add(1.0)
           + jnp.eye(N, dtype=jnp.float32))
    deg = adj.sum(axis=1)                              # incl. self-loop -> >= 1
    dinv = lax.rsqrt(deg)
    ahat = adj * dinv[:, None] * dinv[None, :]

    # ---- mean-pool matrix and its algebraic collapse with A_hat / layer-2 / Linear
    onehot = (jnp.arange(num_graphs)[:, None] == batch[None, :]).astype(jnp.float32)
    pmean = onehot / jnp.maximum(onehot.sum(axis=1, keepdims=True), 1.0)
    pa = pmean @ ahat                                   # [B, N]
    wf = params["w2"] @ params["wl"]                    # [H, C]
    bf = params["b2"] @ params["wl"] + params["bl"]     # [1, C]

    H = params["w1"].shape[1]
    C = params["wl"].shape[1]
    Hp = _round_up(H, 128)                              # lane-dense hidden
    Cp = _round_up(C, 128)                              # lane-dense output store

    # ---- row-tile size (multiple of 8, capped by graph size); pad N to a multiple of it
    tm = min(tm, _round_up(N, 8))
    tm = max(8, (tm // 8) * 8)
    N_pad = _round_up(N, tm)

    ahat_p = jnp.zeros((N_pad, N_pad), jnp.bfloat16).at[:N, :N].set(
        ahat.astype(jnp.bfloat16))                      # bf16: halves O(N^2) DMA bytes
    pat_p = jnp.zeros((N_pad, num_graphs), jnp.float32).at[:N, :].set(pa.T)
    x_p = jnp.zeros((N_pad, F), jnp.bfloat16).at[:N, :].set(x.astype(jnp.bfloat16))
    w1_p = jnp.zeros((F, Hp), jnp.float32).at[:, :H].set(params["w1"])
    b1_p = jnp.zeros((1, Hp), jnp.float32).at[:, :H].set(params["b1"])
    wf_p = jnp.zeros((Hp, Cp), jnp.float32).at[:H, :C].set(wf)
    bf_p = jnp.zeros((1, Cp), jnp.float32).at[:, :C].set(bf)
    # zero padding is exact: padded A_hat rows contribute only where PA^T rows are zero,
    # padded hidden columns stay zero through relu, padded class columns are sliced off.

    grid = (N_pad // tm,)
    out_p = pl.pallas_call(
        gcn_fused_kernel,
        out_shape=jax.ShapeDtypeStruct((num_graphs, Cp), jnp.float32),
        grid=grid,
        in_specs=[
            pl.BlockSpec((tm, N_pad), lambda i: (i, 0)),         # A_hat row tile (streamed)
            pl.BlockSpec((tm, num_graphs), lambda i: (i, 0)),    # PA^T row tile (streamed)
            pl.BlockSpec((N_pad, F), lambda i: (0, 0)),          # X resident
            pl.BlockSpec((F, Hp), lambda i: (0, 0)),             # W1 resident
            pl.BlockSpec((1, Hp), lambda i: (0, 0)),             # b1 resident
            pl.BlockSpec((Hp, Cp), lambda i: (0, 0)),            # WF resident
            pl.BlockSpec((1, Cp), lambda i: (0, 0)),             # bF resident
        ],
        out_specs=pl.BlockSpec((num_graphs, Cp), lambda i: (0, 0)),
        scratch_shapes=[pltpu.VMEM((num_graphs, Hp), jnp.float32)],
        # row axis is a reduction into the pooled accumulator -> "arbitrary"
        compiler_params=pltpu.CompilerParams(dimension_semantics=("arbitrary",)),
    )(ahat_p, pat_p, x_p, w1_p, b1_p, wf_p, bf_p)

    return out_p[:, :C]


# ----------------------------------------------------------------------------
# Deterministic parameter init (shapes from GCN.__init__)
# ----------------------------------------------------------------------------
def init_params(key, in_features, hidden, num_classes):
    ks = jax.random.split(key, 6)

    def dense(k, shape, scale=0.2):
        return jax.random.normal(k, shape, jnp.float32) * scale

    return dict(
        w1=dense(ks[0], (in_features, hidden)), b1=dense(ks[1], (1, hidden)),
        w2=dense(ks[2], (hidden, hidden)),      b2=dense(ks[3], (1, hidden)),
        wl=dense(ks[4], (hidden, num_classes)), bl=dense(ks[5], (1, num_classes)),
    )


# ----------------------------------------------------------------------------
# Pure-JAX reference (gather / segment_sum formulation) for validation
# ----------------------------------------------------------------------------
def _ref_gcn_conv(x, w, b, src, tgt, num_nodes):
    xw = x @ w
    loops = jnp.arange(num_nodes, dtype=src.dtype)
    s = jnp.concatenate([src, loops])
    t = jnp.concatenate([tgt, loops])
    deg = jax.ops.segment_sum(jnp.ones_like(t, jnp.float32), t, num_segments=num_nodes)
    dinv = lax.rsqrt(deg)
    norm = dinv[s] * dinv[t]
    msgs = norm[:, None] * xw[s]
    return jax.ops.segment_sum(msgs, t, num_segments=num_nodes) + b


def ref_forward(params, x, edge_index, batch, num_graphs):
    if x.ndim == 1:
        x = x[:, None]
    N = x.shape[0]
    src, tgt = edge_index[0], edge_index[1]
    h = jax.nn.relu(_ref_gcn_conv(x, params["w1"], params["b1"], src, tgt, N))
    h = _ref_gcn_conv(h, params["w2"], params["b2"], src, tgt, N)
    counts = jax.ops.segment_sum(jnp.ones((N, 1), jnp.float32), batch,
                                 num_segments=num_graphs)
    pooled = jax.ops.segment_sum(h, batch, num_segments=num_graphs) / jnp.maximum(counts, 1.0)
    return pooled @ params["wl"] + params["bl"]


# ----------------------------------------------------------------------------
if __name__ == "__main__":
    key = jax.random.PRNGKey(0)
    k_param, k_x, k_src, k_tgt = jax.random.split(key, 4)

    in_features, hidden, num_classes = 4, 32, 3
    nodes_per_graph, num_graphs = 16, 2
    edges_per_graph = 48
    N = nodes_per_graph * num_graphs                    # 32 nodes
    E = edges_per_graph * num_graphs                    # 96 directed edges (pre-mirroring)

    x = jax.random.normal(k_x, (N, in_features), jnp.float32)
    g = jnp.repeat(jnp.arange(num_graphs, dtype=jnp.int32), edges_per_graph)
    src = jax.random.randint(k_src, (E,), 0, nodes_per_graph, jnp.int32) + g * nodes_per_graph
    tgt = jax.random.randint(k_tgt, (E,), 0, nodes_per_graph, jnp.int32) + g * nodes_per_graph
    # undirected graph, PyG-style: both directions present
    edge_index = jnp.concatenate([jnp.stack([src, tgt]), jnp.stack([tgt, src])], axis=1)
    batch = jnp.repeat(jnp.arange(num_graphs, dtype=jnp.int32), nodes_per_graph)

    params = init_params(k_param, in_features, hidden, num_classes)

    # tm=8 -> 4-step row-tiled grid even at this toy N, exercising the pipelined
    # A_hat / PA^T streams and the pl.when accumulator init/finalize.
    out = gcn_forward(params, x, edge_index, batch, num_graphs, tm=8)
    out = jax.block_until_ready(out)

    ref = ref_forward(params, x, edge_index, batch, num_graphs)
    assert out.shape == (num_graphs, num_classes), out.shape
    # tolerance accounts for bf16 storage of A_hat / X (accumulation stays f32)
    assert jnp.allclose(out, ref, rtol=2e-2, atol=2e-2), (out, ref)
    print("KERNEL_OK")
</pallas_src>

<mosaic_0001>
module attributes {stable_mosaic.version = 11 : i64} {
  func.func @gcn_fused_kernel(%arg0: i32, %arg1: memref<8x32xbf16, #tpu.memory_space<vmem>>, %arg2: memref<8x2xf32, #tpu.memory_space<vmem>>, %arg3: memref<32x4xbf16, #tpu.memory_space<vmem>>, %arg4: memref<4x128xf32, #tpu.memory_space<vmem>>, %arg5: memref<1x128xf32, #tpu.memory_space<vmem>>, %arg6: memref<128x128xf32, #tpu.memory_space<vmem>>, %arg7: memref<1x128xf32, #tpu.memory_space<vmem>>, %arg8: memref<2x128xf32, #tpu.memory_space<vmem>>, %arg9: memref<2x128xf32, #tpu.memory_space<vmem>>) attributes {dimension_semantics = [#tpu.dimension_semantics<arbitrary>], iteration_bounds = array<i64: 4>, scalar_prefetch = 0 : i64, scratch_operands = 1 : i64, tpu.core_type = #tpu.core_type<tc>, window_params = [{transform_indices = @transform_0, window_bounds = array<i64: 8, 32>}, {transform_indices = @transform_1, window_bounds = array<i64: 8, 2>}, {pipeline_mode = #tpu.pipeline_mode<synchronous>, transform_indices = @transform_2, window_bounds = array<i64: 32, 4>}, {pipeline_mode = #tpu.pipeline_mode<synchronous>, transform_indices = @transform_3, window_bounds = array<i64: 4, 128>}, {pipeline_mode = #tpu.pipeline_mode<synchronous>, transform_indices = @transform_4, window_bounds = array<i64: 1, 128>}, {pipeline_mode = #tpu.pipeline_mode<synchronous>, transform_indices = @transform_5, window_bounds = array<i64: 128, 128>}, {pipeline_mode = #tpu.pipeline_mode<synchronous>, transform_indices = @transform_6, window_bounds = array<i64: 1, 128>}, {pipeline_mode = #tpu.pipeline_mode<synchronous>, transform_indices = @transform_7, window_bounds = array<i64: 2, 128>}]} {
    %c0_i32 = arith.constant 0 : i32
    %0 = arith.cmpi eq, %arg0, %c0_i32 : i32
    %1 = arith.extui %0 : i1 to i32
    %c0_i32_0 = arith.constant 0 : i32
    %2 = arith.cmpi ne, %1, %c0_i32_0 : i32
    scf.if %2 {
      %cst_18 = arith.constant 0.000000e+00 : f32
      %21 = vector.broadcast %cst_18 : f32 to vector<2x128xf32>
      %c0_19 = arith.constant 0 : index
      %c0_20 = arith.constant 0 : index
      %22 = vector.load %arg9[%c0_19, %c0_20] : memref<2x128xf32, #tpu.memory_space<vmem>>, vector<2x128xf32>
      tpu.vector_store %arg9[%c0_19, %c0_20], %21 {strides = array<i32>} : memref<2x128xf32, #tpu.memory_space<vmem>>, vector<2x128xf32>,
    } else {
    }
    %c0 = arith.constant 0 : index
    %c0_1 = arith.constant 0 : index
    %3 = vector.load %arg1[%c0, %c0_1] : memref<8x32xbf16, #tpu.memory_space<vmem>>, vector<8x32xbf16>
    %c0_2 = arith.constant 0 : index
    %c0_3 = arith.constant 0 : index
    %4 = vector.load %arg3[%c0_2, %c0_3] : memref<32x4xbf16, #tpu.memory_space<vmem>>, vector<32x4xbf16>
    %cst = arith.constant dense<0.000000e+00> : vector<8x4xf32>
    %5 = tpu.matmul %3, %4, %cst {dimension_numbers = #tpu.dot_dimension_numbers<[1], [0], [0], [1], [0, 0, 1, 1], [], []>} : vector<8x32xbf16>, vector<32x4xbf16>, vector<8x4xf32> -> vector<8x4xf32>
    %c0_4 = arith.constant 0 : index
    %c0_5 = arith.constant 0 : index
    %6 = vector.load %arg4[%c0_4, %c0_5] : memref<4x128xf32, #tpu.memory_space<vmem>>, vector<4x128xf32>
    %cst_6 = arith.constant dense<0.000000e+00> : vector<8x128xf32>
    %7 = tpu.matmul %5, %6, %cst_6 {dimension_numbers = #tpu.dot_dimension_numbers<[1], [0], [0], [1], [0, 0, 1, 1], [], []>} : vector<8x4xf32>, vector<4x128xf32>, vector<8x128xf32> -> vector<8x128xf32>
    %c0_7 = arith.constant 0 : index
    %c0_8 = arith.constant 0 : index
    %8 = vector.load %arg5[%c0_7, %c0_8] : memref<1x128xf32, #tpu.memory_space<vmem>>, vector<1x128xf32>
    %9 = vector.broadcast %8 : vector<1x128xf32> to vector<8x128xf32>
    %10 = arith.addf %7, %9 : vector<8x128xf32>
    %cst_9 = arith.constant 0.000000e+00 : f32
    %11 = vector.broadcast %cst_9 : f32 to vector<8x128xf32>
    %12 = arith.maximumf %10, %11 : vector<8x128xf32>
    %c0_10 = arith.constant 0 : index
    %c0_11 = arith.constant 0 : index
    %13 = vector.load %arg9[%c0_10, %c0_11] : memref<2x128xf32, #tpu.memory_space<vmem>>, vector<2x128xf32>
    %c0_12 = arith.constant 0 : index
    %c0_13 = arith.constant 0 : index
    %14 = vector.load %arg2[%c0_12, %c0_13] : memref<8x2xf32, #tpu.memory_space<vmem>>, vector<8x2xf32>
    %cst_14 = arith.constant dense<0.000000e+00> : vector<2x128xf32>
    %15 = tpu.matmul %14, %12, %cst_14 {dimension_numbers = #tpu.dot_dimension_numbers<[0], [0], [1], [1], [0, 1, 1, 1], [], []>} : vector<8x2xf32>, vector<8x128xf32>, vector<2x128xf32> -> vector<2x128xf32>
    %16 = arith.addf %13, %15 : vector<2x128xf32>
    %c0_15 = arith.constant 0 : index
    %c0_16 = arith.constant 0 : index
    %17 = vector.load %arg9[%c0_15, %c0_16] : memref<2x128xf32, #tpu.memory_space<vmem>>, vector<2x128xf32>
    tpu.vector_store %arg9[%c0_15, %c0_16], %16 {strides = array<i32>} : memref<2x128xf32, #tpu.memory_space<vmem>>, vector<2x128xf32>,
    %c3_i32 = arith.constant 3 : i32
    %18 = arith.cmpi eq, %arg0, %c3_i32 : i32
    %19 = arith.extui %18 : i1 to i32
    %c0_i32_17 = arith.constant 0 : i32
    %20 = arith.cmpi ne, %19, %c0_i32_17 : i32
    scf.if %20 {
      %c0_18 = arith.constant 0 : index
      %c0_19 = arith.constant 0 : index
      %21 = vector.load %arg9[%c0_18, %c0_19] : memref<2x128xf32, #tpu.memory_space<vmem>>, vector<2x128xf32>
      %c0_20 = arith.constant 0 : index
      %c0_21 = arith.constant 0 : index
      %22 = vector.load %arg6[%c0_20, %c0_21] : memref<128x128xf32, #tpu.memory_space<vmem>>, vector<128x128xf32>
      %cst_22 = arith.constant dense<0.000000e+00> : vector<2x128xf32>
      %23 = tpu.matmul %21, %22, %cst_22 {dimension_numbers = #tpu.dot_dimension_numbers<[1], [0], [0], [1], [0, 0, 1, 1], [], []>} : vector<2x128xf32>, vector<128x128xf32>, vector<2x128xf32> -> vector<2x128xf32>
      %c0_23 = arith.constant 0 : index
      %c0_24 = arith.constant 0 : index
      %24 = vector.load %arg7[%c0_23, %c0_24] : memref<1x128xf32, #tpu.memory_space<vmem>>, vector<1x128xf32>
      %25 = vector.broadcast %24 : vector<1x128xf32> to vector<2x128xf32>
      %26 = arith.addf %23, %25 : vector<2x128xf32>
      %c0_25 = arith.constant 0 : index
      %c0_26 = arith.constant 0 : index
      %27 = vector.load %arg8[%c0_25, %c0_26] : memref<2x128xf32, #tpu.memory_space<vmem>>, vector<2x128xf32>
      tpu.vector_store %arg8[%c0_25, %c0_26], %26 {strides = array<i32>} : memref<2x128xf32, #tpu.memory_space<vmem>>, vector<2x128xf32>,
    } else {
    }
    return
  }
  func.func @transform_0(%arg0: i32) -> (i32, i32) {
    %c0_i32 = arith.constant 0 : i32
    %c0_i32_0 = arith.constant 0 : i32
    return %arg0, %c0_i32 : i32, i32
  }
  func.func @transform_1(%arg0: i32) -> (i32, i32) {
    %c0_i32 = arith.constant 0 : i32
    %c0_i32_0 = arith.constant 0 : i32
    return %arg0, %c0_i32 : i32, i32
  }
  func.func @transform_2(%arg0: i32) -> (i32, i32) {
    %c0_i32 = arith.constant 0 : i32
    %c0_i32_0 = arith.constant 0 : i32
    %c0_i32_1 = arith.constant 0 : i32
    return %c0_i32, %c0_i32_0 : i32, i32
  }
  func.func @transform_3(%arg0: i32) -> (i32, i32) {
    %c0_i32 = arith.constant 0 : i32
    %c0_i32_0 = arith.constant 0 : i32
    %c0_i32_1 = arith.constant 0 : i32
    return %c0_i32, %c0_i32_0 : i32, i32
  }
  func.func @transform_4(%arg0: i32) -> (i32, i32) {
    %c0_i32 = arith.constant 0 : i32
    %c0_i32_0 = arith.constant 0 : i32
    %c0_i32_1 = arith.constant 0 : i32
    return %c0_i32, %c0_i32_0 : i32, i32
  }
  func.func @transform_5(%arg0: i32) -> (i32, i32) {
    %c0_i32 = arith.constant 0 : i32
    %c0_i32_0 = arith.constant 0 : i32
    %c0_i32_1 = arith.constant 0 : i32
    return %c0_i32, %c0_i32_0 : i32, i32
  }
  func.func @transform_6(%arg0: i32) -> (i32, i32) {
    %c0_i32 = arith.constant 0 : i32
    %c0_i32_0 = arith.constant 0 : i32
    %c0_i32_1 = arith.constant 0 : i32
    return %c0_i32, %c0_i32_0 : i32, i32
  }
  func.func @transform_7(%arg0: i32) -> (i32, i32) {
    %c0_i32 = arith.constant 0 : i32
    %c0_i32_0 = arith.constant 0 : i32
    %c0_i32_1 = arith.constant 0 : i32
    return %c0_i32, %c0_i32_0 : i32, i32
  }
}

</mosaic_0001>

<llo_original>
// kernel: tpu_custom_call.1
$region0: #{tpu_custom_call.1}
  #allocation0 [shape = 'u32[]', space=smem, size = 0x4, offset = 0x4, fixed_abs, tag = 'smem constant byte address 0x4 - core index']
  #allocation1 [shape = 'u32[72,128]{1,0:T(1,128)}', space=vmem, size = 0x9000, scoped, tag = 'internal scratch']
  #allocation2 [shape = 'f32[2,128]{1,0:T(2,128)}', space=vmem, size = 0x400, scoped, tag = 'scratch operand']
  %s0 = inlined_call_operand.vmem [shape: bf16[32,32], index: 0, kind: input, shape index: {}]
  %s1 = inlined_call_operand.vmem [shape: f32[32,2], index: 1, kind: input, shape index: {}]
  %s2 = inlined_call_operand.vmem [shape: bf16[32,4], index: 2, kind: input, shape index: {}]
  %s3 = inlined_call_operand.vmem [shape: f32[4,128], index: 3, kind: input, shape index: {}]
  %s4 = inlined_call_operand.vmem [shape: f32[1,128], index: 4, kind: input, shape index: {}]
  %s5 = inlined_call_operand.hbm [shape: f32[128,128], index: 5, kind: input, shape index: {}]
  %s6 = inlined_call_operand.vmem [shape: f32[1,128], index: 6, kind: input, shape index: {}]
  %s7 = inlined_call_operand.hbm [shape: f32[2,128], index: 7, kind: output, shape index: {}]
  %s8 = sld [smem:[#allocation0]]
  $region73: #{tpu_custom_call.1} parent=0
    _
  %s10 = ssub.s32 1, %s8
  %s11 = scalar_select 0, %s10, %s8
  $region1: #{tpu_custom_call.1} parent=0
    #allocation3 [shape = 'u8[65536]{0}', space=vmem, size = 0x10000, scoped, tag = 'input window, operand 5, single buffered']
    #allocation4 [shape = 's32[2]{0}', space=sflag, size = 0x8, scoped, tag = 'scoped memory for tpu_custom_call.1']
    #allocation5 [shape = 's32[2]{0}', space=sflag, size = 0x8, scoped, tag = 'scoped memory for tpu_custom_call.1']
    #allocation6 [shape = 'u8[1024]{0}', space=vmem, size = 0x400, scoped, tag = 'output window, operand 0, single buffered']
    %12 = vsyncpa [#allocation4], 0
    %13 = vsyncpa [#allocation5], 0
    loop: start=0, step=1, limit=6
    $region2: #{tpu_custom_call.1} parent=1 // loop_pre_header
      _
    $region3: #{tpu_custom_call.1} parent=1 // loop_header
      %s15 = sphi 0, %s19
      %p16 = scmp.ge.s32.totalorder %s15, 6
      %s25 = sphi 0, %s27
      %s28 = sphi 0, %s25
      %s29 = sphi 0, %s28
      %s45 = sphi 0, %s29
      %s51 = sphi 0, %s53
      %s54 = sphi 0, %s51
      %s55 = sphi 0, %s54
      %s71 = sphi 0, %s55
      %s75 = sphi 0, %s75
      %s77 = sphi 0, %s75
      %s78 = sphi 0, %s77
      %s92 = sphi 0, %s78
      %s96 = sphi 0, %s96
      %s98 = sphi 0, %s96
      %s99 = sphi 0, %s98
      %s113 = sphi 0, %s99
      %s117 = sphi 0, %s117
      %s119 = sphi 0, %s117
      %s120 = sphi 0, %s119
      %s134 = sphi 0, %s120
      %s138 = sphi 0, %s138
      %s140 = sphi 0, %s138
      %s141 = sphi 0, %s140
      %s155 = sphi 0, %s141
      %s159 = sphi 0, %s159
      %s161 = sphi 0, %s159
      %s162 = sphi 0, %s161
      %s176 = sphi 0, %s162
      %s180 = sphi 0, %s180
      %s182 = sphi 0, %s180
      %s183 = sphi 0, %s182
      %s197 = sphi 0, %s183
    $region4: #{tpu_custom_call.1} parent=1 // loop_header_branch
      %18 = sbr.rel (%p16) target = $region8
    $region5: #{tpu_custom_call.1} parent=1 // loop_body
      %s20 = ssub.s32 %s15, 1
      %s21 = ssub.s32 %s15, 2
      %s22 = sadd.s32 %s15, 1
      %s23 = ssub.s32 %s15, %s22
      %p24 = scmp.eq.s32.totalorder %s23, 0
      %s26 = sadd.s32 %s25, 1
      %s27 = scalar_select %p24, %s25, %s26
      %p30 = pneg %p24
      %p31 = scmp.eq.s32.totalorder %s15, 3
      %p32 = por %p30, %p31
      %p33 = scmp.ne.s32.totalorder %s25, %s28
      %p34 = scmp.eq.s32.totalorder %s15, 0
      %p35 = por %p33, %p34
      %p36 = scmp.ne.s32.totalorder %s25, %s28
      %p37 = scmp.eq.s32.totalorder %s20, 3
      %p38 = por %p36, %p37
      %p39 = scmp.ne.s32.totalorder %s28, %s29
      %p40 = scmp.eq.s32.totalorder %s20, 0
      %p41 = por %p39, %p40
      %p42 = scmp.ne.s32.totalorder %s28, %s29
      %p43 = scmp.eq.s32.totalorder %s21, 3
      %p44 = por %p42, %p43
      %p46 = scmp.ne.s32.totalorder %s29, %s45
      %p47 = scmp.eq.s32.totalorder %s21, 0
      %p48 = por %p46, %p47
      %s49 = ssub.s32 %s15, %s22
      %p50 = scmp.eq.s32.totalorder %s49, 0
      %s52 = sadd.s32 %s51, 1
      %s53 = scalar_select %p50, %s51, %s52
      %p56 = pneg %p50
      %p57 = scmp.eq.s32.totalorder %s15, 3
      %p58 = por %p56, %p57
      %p59 = scmp.ne.s32.totalorder %s51, %s54
      %p60 = scmp.eq.s32.totalorder %s15, 0
      %p61 = por %p59, %p60
      %p62 = scmp.ne.s32.totalorder %s51, %s54
      %p63 = scmp.eq.s32.totalorder %s20, 3
      %p64 = por %p62, %p63
      %p65 = scmp.ne.s32.totalorder %s54, %s55
      %p66 = scmp.eq.s32.totalorder %s20, 0
      %p67 = por %p65, %p66
      %p68 = scmp.ne.s32.totalorder %s54, %s55
      %p69 = scmp.eq.s32.totalorder %s21, 3
      %p70 = por %p68, %p69
      %p72 = scmp.ne.s32.totalorder %s55, %s71
      %p73 = scmp.eq.s32.totalorder %s21, 0
      %p74 = por %p72, %p73
      %s76 = sadd.s32 %s75, 1
      %p79 = scmp.eq.s32.totalorder %s15, 3
      %p80 = scmp.ne.s32.totalorder %s75, %s77
      %p81 = scmp.eq.s32.totalorder %s15, 0
      %p82 = por %p80, %p81
      %p83 = scmp.ne.s32.totalorder %s75, %s77
      %p84 = scmp.eq.s32.totalorder %s20, 3
      %p85 = por %p83, %p84
      %p86 = scmp.ne.s32.totalorder %s77, %s78
      %p87 = scmp.eq.s32.totalorder %s20, 0
      %p88 = por %p86, %p87
      %p89 = scmp.ne.s32.totalorder %s77, %s78
      %p90 = scmp.eq.s32.totalorder %s21, 3
      %p91 = por %p89, %p90
      %p93 = scmp.ne.s32.totalorder %s78, %s92
      %p94 = scmp.eq.s32.totalorder %s21, 0
      %p95 = por %p93, %p94
      %s97 = sadd.s32 %s96, 1
      %p100 = scmp.eq.s32.totalorder %s15, 3
      %p101 = scmp.ne.s32.totalorder %s96, %s98
      %p102 = scmp.eq.s32.totalorder %s15, 0
      %p103 = por %p101, %p102
      %p104 = scmp.ne.s32.totalorder %s96, %s98
      %p105 = scmp.eq.s32.totalorder %s20, 3
      %p106 = por %p104, %p105
      %p107 = scmp.ne.s32.totalorder %s98, %s99
      %p108 = scmp.eq.s32.totalorder %s20, 0
      %p109 = por %p107, %p108
      %p110 = scmp.ne.s32.totalorder %s98, %s99
      %p111 = scmp.eq.s32.totalorder %s21, 3
      %p112 = por %p110, %p111
      %p114 = scmp.ne.s32.totalorder %s99, %s113
      %p115 = scmp.eq.s32.totalorder %s21, 0
      %p116 = por %p114, %p115
      %s118 = sadd.s32 %s117, 1
      %p121 = scmp.eq.s32.totalorder %s15, 3
      %p122 = scmp.ne.s32.totalorder %s117, %s119
      %p123 = scmp.eq.s32.totalorder %s15, 0
      %p124 = por %p122, %p123
      %p125 = scmp.ne.s32.totalorder %s117, %s119
      %p126 = scmp.eq.s32.totalorder %s20, 3
      %p127 = por %p125, %p126
      %p128 = scmp.ne.s32.totalorder %s119, %s120
      %p129 = scmp.eq.s32.totalorder %s20, 0
      %p130 = por %p128, %p129
      %p131 = scmp.ne.s32.totalorder %s119, %s120
      %p132 = scmp.eq.s32.totalorder %s21, 3
      %p133 = por %p131, %p132
      %p135 = scmp.ne.s32.totalorder %s120, %s134
      %p136 = scmp.eq.s32.totalorder %s21, 0
      %p137 = por %p135, %p136
      %s139 = sadd.s32 %s138, 1
      %p142 = scmp.eq.s32.totalorder %s15, 3
      %p143 = scmp.ne.s32.totalorder %s138, %s140
      %p144 = scmp.eq.s32.totalorder %s15, 0
      %p145 = por %p143, %p144
      %p146 = scmp.ne.s32.totalorder %s138, %s140
      %p147 = scmp.eq.s32.totalorder %s20, 3
      %p148 = por %p146, %p147
      %p149 = scmp.ne.s32.totalorder %s140, %s141
      %p150 = scmp.eq.s32.totalorder %s20, 0
      %p151 = por %p149, %p150
      %p152 = scmp.ne.s32.totalorder %s140, %s141
      %p153 = scmp.eq.s32.totalorder %s21, 3
      %p154 = por %p152, %p153
      %p156 = scmp.ne.s32.totalorder %s141, %s155
      %p157 = scmp.eq.s32.totalorder %s21, 0
      %p158 = por %p156, %p157
      %s160 = sadd.s32 %s159, 1
      %p163 = scmp.eq.s32.totalorder %s15, 3
      %p164 = scmp.ne.s32.totalorder %s159, %s161
      %p165 = scmp.eq.s32.totalorder %s15, 0
      %p166 = por %p164, %p165
      %p167 = scmp.ne.s32.totalorder %s159, %s161
      %p168 = scmp.eq.s32.totalorder %s20, 3
      %p169 = por %p167, %p168
      %p170 = scmp.ne.s32.totalorder %s161, %s162
      %p171 = scmp.eq.s32.totalorder %s20, 0
      %p172 = por %p170, %p171
      %p173 = scmp.ne.s32.totalorder %s161, %s162
      %p174 = scmp.eq.s32.totalorder %s21, 3
      %p175 = por %p173, %p174
      %p177 = scmp.ne.s32.totalorder %s162, %s176
      %p178 = scmp.eq.s32.totalorder %s21, 0
      %p179 = por %p177, %p178
      %s181 = sadd.s32 %s180, 1
      %p184 = scmp.eq.s32.totalorder %s15, 3
      %p185 = scmp.ne.s32.totalorder %s180, %s182
      %p186 = scmp.eq.s32.totalorder %s15, 0
      %p187 = por %p185, %p186
      %p188 = scmp.ne.s32.totalorder %s180, %s182
      %p189 = scmp.eq.s32.totalorder %s20, 3
      %p190 = por %p188, %p189
      %p191 = scmp.ne.s32.totalorder %s182, %s183
      %p192 = scmp.eq.s32.totalorder %s20, 0
      %p193 = por %p191, %p192
      %p194 = scmp.ne.s32.totalorder %s182, %s183
      %p195 = scmp.eq.s32.totalorder %s21, 3
      %p196 = por %p194, %p195
      %p198 = scmp.ne.s32.totalorder %s183, %s197
      %p199 = scmp.eq.s32.totalorder %s21, 0
      %p200 = por %p198, %p199
      %p201 = scmp.le.s32.totalorder 1, %s15
      %p202 = scmp.lt.s32.totalorder %s15, 5
      %p203 = pnand %p201, %p202
      %p204 = pneg %p203
      // Predicated region
      $region9: #{tpu_custom_call.1} parent=5 // pred_check
        _
      $region10: #{tpu_custom_call.1} parent=5 // pred_check_branch
        %206 = sbr.rel (%p203) target = $region12
      $region11: #{tpu_custom_call.1} parent=5 // pred_region
        %s207 = ssub.s32 %s15, 1
        // Predicated region
        $region13: #{tpu_custom_call.1} parent=11 // pred_check
          %p208 = pneg %p88
        $region14: #{tpu_custom_call.1} parent=11 // pred_check_branch
          %210 = sbr.rel (%p208) target = $region16
        $region15: #{tpu_custom_call.1} parent=11 // pred_region
          _
        $region16: #{tpu_custom_call.1} parent=11 // pred_fallthru
          _
        // Predicated region
        $region17: #{tpu_custom_call.1} parent=11 // pred_check
          %p211 = pneg %p109
        $region18: #{tpu_custom_call.1} parent=11 // pred_check_branch
          %213 = sbr.rel (%p211) target = $region20
        $region19: #{tpu_custom_call.1} parent=11 // pred_region
          _
        $region20: #{tpu_custom_call.1} parent=11 // pred_fallthru
          _
        // Predicated region
        $region21: #{tpu_custom_call.1} parent=11 // pred_check
          %p214 = pneg %p130
        $region22: #{tpu_custom_call.1} parent=11 // pred_check_branch
          %216 = sbr.rel (%p214) target = $region24
        $region23: #{tpu_custom_call.1} parent=11 // pred_region
          _
        $region24: #{tpu_custom_call.1} parent=11 // pred_fallthru
          _
        // Predicated region
        $region25: #{tpu_custom_call.1} parent=11 // pred_check
          %p217 = pneg %p151
        $region26: #{tpu_custom_call.1} parent=11 // pred_check_branch
          %219 = sbr.rel (%p217) target = $region28
        $region27: #{tpu_custom_call.1} parent=11 // pred_region
          %221 = vsyncadd [#allocation4], 0
          %s222 = sshll.u32 %s5, 4
          %s223 = int_to_ptr.hbm [resolvable:$true] %s222
          %s224 = sshll.u32 [#allocation3], 4
          %s225 = int_to_ptr.vmem [resolvable:$true] %s224
          %230 = dma.hbm_to_vmem [thread:$0]  %s223, 2048, %s225, [#allocation4], 128, 128, 8
        $region28: #{tpu_custom_call.1} parent=11 // pred_fallthru
          _
        // Predicated region
        $region29: #{tpu_custom_call.1} parent=11 // pred_check
          %p231 = pneg %p172
        $region30: #{tpu_custom_call.1} parent=11 // pred_check_branch
          %233 = sbr.rel (%p231) target = $region32
        $region31: #{tpu_custom_call.1} parent=11 // pred_region
          _
        $region32: #{tpu_custom_call.1} parent=11 // pred_fallthru
          _
      $region12: #{tpu_custom_call.1} parent=5 // pred_fallthru
        _
      %p234 = scmp.lt.s32.totalorder %s15, 4
      // Predicated region
      $region33: #{tpu_custom_call.1} parent=5 // pred_check
        %p235 = pneg %p234
      $region34: #{tpu_custom_call.1} parent=5 // pred_check_branch
        %237 = sbr.rel (%p235) target = $region36
      $region35: #{tpu_custom_call.1} parent=5 // pred_region
        // Predicated region
        $region37: #{tpu_custom_call.1} parent=35 // pred_check
          %p238 = pneg %p35
        $region38: #{tpu_custom_call.1} parent=35 // pred_check_branch
          %240 = sbr.rel (%p238) target = $region40
        $region39: #{tpu_custom_call.1} parent=35 // pred_region
          %p241 = scmp.lt.s32.totalorder %s15, 3
          %s242 = scalar_select %p241, %s15, 3
          %s243 = smul.addr %s242, 4
          %s244 = scalar_lea.vmem %s0, %s243
        $region40: #{tpu_custom_call.1} parent=35 // pred_fallthru
          _
        // Predicated region
        $region41: #{tpu_custom_call.1} parent=35 // pred_check
          %p245 = pneg %p61
        $region42: #{tpu_custom_call.1} parent=35 // pred_check_branch
          %247 = sbr.rel (%p245) target = $region44
        $region43: #{tpu_custom_call.1} parent=35 // pred_region
          %p248 = scmp.lt.s32.totalorder %s15, 3
          %s249 = scalar_select %p248, %s15, 3
          %s250 = smul.addr %s249, 8
          %s251 = scalar_lea.vmem %s1, %s250
        $region44: #{tpu_custom_call.1} parent=35 // pred_fallthru
          _
      $region36: #{tpu_custom_call.1} parent=5 // pred_fallthru
        _
      %p252 = scmp.le.s32.totalorder 1, %s15
      %p253 = scmp.lt.s32.totalorder %s15, 5
      %p254 = pnand %p252, %p253
      %p255 = pneg %p254
      // Predicated region
      $region45: #{tpu_custom_call.1} parent=5 // pred_check
        _
      $region46: #{tpu_custom_call.1} parent=5 // pred_check_branch
        %257 = sbr.rel (%p254) target = $region48
      $region47: #{tpu_custom_call.1} parent=5 // pred_region
        %s258 = ssub.s32 %s15, 1
        // Predicated region
        $region49: #{tpu_custom_call.1} parent=47 // pred_check
          %p259 = pneg %p151
        $region50: #{tpu_custom_call.1} parent=47 // pred_check_branch
          %261 = sbr.rel (%p259) target = $region52
        $region51: #{tpu_custom_call.1} parent=47 // pred_region
          %263 = dma.done [#allocation4], 2048
        $region52: #{tpu_custom_call.1} parent=47 // pred_fallthru
          _
        %p264 = scmp.lt.s32.totalorder %s20, 3
        %s265 = scalar_select %p264, %s20, 3
        %s266 = smul.addr %s265, 4
        %s267 = scalar_lea.vmem %s0, %s266
        %p268 = pneg %p41
        %p269 = pneg %p38
        %p270 = scmp.lt.s32.totalorder %s20, 3
        %s271 = scalar_select %p270, %s20, 3
        %s272 = smul.addr %s271, 8
        %s273 = scalar_lea.vmem %s1, %s272
        %p274 = pneg %p67
        %p275 = pneg %p64
        %p276 = pneg %p88
        %p277 = pneg %p85
        %p278 = pneg %p109
        %p279 = pneg %p106
        %p280 = pneg %p130
        %p281 = pneg %p127
        %p282 = pneg %p151
        %p283 = pneg %p148
        %p284 = pneg %p172
        %p285 = pneg %p169
        %p286 = pneg %p193
        %p287 = pneg %p190
        %p288 = scmp.lt.s32.totalorder %s20, 3
        %s289 = scalar_select %p288, %s20, 3
        %s290 = smul.addr %s289, 4
        %s291 = scalar_lea.vmem %s0, %s290
        %p292 = scmp.lt.s32.totalorder %s20, 3
        %s293 = scalar_select %p292, %s20, 3
        %s294 = smul.addr %s293, 8
        %s295 = scalar_lea.vmem %s1, %s294
        %p297 = scmp.eq.s32.totalorder %s20, 0
        // Predicated region
        $region53: #{tpu_custom_call.1} parent=47 // pred_check
          %p298 = pneg %p297
        $region54: #{tpu_custom_call.1} parent=47 // pred_check_branch
          %300 = sbr.rel (%p298) target = $region56
        $region55: #{tpu_custom_call.1} parent=47 // pred_region
          %301 = vst [vmem:[#allocation2] sm:$0x3] 0.0
        $region56: #{tpu_custom_call.1} parent=47 // pred_fallthru
          _
        %v302 = vld [vmem:[%s291] sm:$0xf]
        %v303 = vld [vmem:[%s2] sm:$0xf]
        %v304 = vld [vmem:[%s2 + $0x4] sm:$0xf]
        %v305 = vld [vmem:[%s2 + $0x8] sm:$0xf]
        %v306 = vld [vmem:[%s2 + $0xc] sm:$0xf]
        %v311 = vunpack.c.l.b16 %v303
        %v312 = vunpack.c.l.b16 %v304
        %v313 = vunpack.c.l.b16 %v305
        %v314 = vunpack.c.l.b16 %v306
        %v315 = vpack.c.b16 %v312, %v311
        %v316 = vpack.c.b16 %v314, %v313
        %vm319 = vcmask 261120
        %v321 = vsel %vm319, %v302, 0
        %323 = vmatpush.bf16.msra.mxu0 0
        %324 = vmatpush.bf16.msra.mxu0 0
        %325 = vmatpush.bf16.msra.mxu0 0
        %326 = vmatpush.bf16.msra.mxu0 0
        %327 = vmatpush.bf16.msra.mxu0 0
        %328 = vmatpush.bf16.msra.mxu0 0
        %329 = vmatpush.bf16.msra.mxu0 %v316
        %330 = vmatpush.bf16.msra.mxu0 %v315
        %331 = vmatmul.bf16.gmra.mxu0 %v321
        %v332 = vpop.f32.mrf.mxu0
        %v333 = vadd.f32 0.0, %v332
        %v334 = vpop.f32.mrf.mxu0
        %335 = vdwg.mxu0
        %v336 = vld [vmem:[%s3] sm:$0xf]
        %v337 = vld [vmem:[%s4] sm:$0x1]
        %v339 = vperm.slane %v337, 0
        %vm341 = vcmask 31744
        %v343 = vsel %vm341, %v333, 0
        %vm345 = vcmask 1043456
        %v347 = vsel %vm345, %v336, 0
        %349 = vmatpush.msra.mxu0 0.0
        %350 = vmatpush.msra.mxu0 0.0
        %351 = vmatpush.msra.mxu0 0.0
        %352 = vmatpush.msra.mxu0 0.0
        %353 = vmatpush.msra.mxu0 0.0
        %354 = vmatpush.msra.mxu0 0.0
        %355 = vmatpush.msra.mxu0 0.0
        %356 = vmatpush.msra.mxu0 0.0
        %357 = vmatpush.msra.mxu0 0.0
        %358 = vmatpush.msra.mxu0 0.0
        %359 = vmatpush.msra.mxu0 0.0
        %360 = vmatpush.msra.mxu0 0.0
        %361 = vmatpush.msra.mxu0 0.0
        %362 = vmatpush.msra.mxu0 0.0
        %363 = vmatpush.msra.mxu0 0.0
        %364 = vmatpush.msra.mxu0 %v347
        %365 = vmatmul.f32.gmra.mxu0 %v343
        %v366 = vpop.f32.mrf.mxu0
        %v367 = vadd.f32 %v339, %v366
        %368 = vdwg.mxu0
        %v369 = vmax.f32 %v367, 0.0
        %v370 = vld [vmem:[#allocation2] sm:$0x3]
        %v371 = vld [vmem:[%s295] sm:$0xff]
        %372 = vxpose.xlu0.b32.start [1/16] %v371, 128
        %373 = vxpose.xlu0.b32.cont [2/16] 0.0, 128
        %374 = vxpose.xlu0.b32.cont [3/16] 0.0, 128
        %375 = vxpose.xlu0.b32.cont [4/16] 0.0, 128
        %376 = vxpose.xlu0.b32.cont [5/16] 0.0, 128
        %377 = vxpose.xlu0.b32.cont [6/16] 0.0, 128
        %378 = vxpose.xlu0.b32.cont [7/16] 0.0, 128
        %379 = vxpose.xlu0.b32.cont [8/16] 0.0, 128
        %380 = vxpose.xlu0.b32.cont [9/16] 0.0, 128
        %381 = vxpose.xlu0.b32.cont [10/16] 0.0, 128
        %382 = vxpose.xlu0.b32.cont [11/16] 0.0, 128
        %383 = vxpose.xlu0.b32.cont [12/16] 0.0, 128
        %384 = vxpose.xlu0.b32.cont [13/16] 0.0, 128
        %385 = vxpose.xlu0.b32.cont [14/16] 0.0, 128
        %386 = vxpose.xlu0.b32.cont [15/16] 0.0, 128
        %387 = vxpose.xlu0.b32.end [16/16] 0.0, 128
        %v388 = vpop.trf.xlu0
        %v389 = vpop.trf.xlu0
        %v390 = vpop.trf.xlu0
        %v391 = vpop.trf.xlu0
        %v392 = vpop.trf.xlu0
        %v393 = vpop.trf.xlu0
        %v394 = vpop.trf.xlu0
        %v395 = vpop.trf.xlu0
        %v396 = vpop.trf.xlu0
        %v397 = vpop.trf.xlu0
        %v398 = vpop.trf.xlu0
        %v399 = vpop.trf.xlu0
        %v400 = vpop.trf.xlu0
        %v401 = vpop.trf.xlu0
        %v402 = vpop.trf.xlu0
        %v403 = vpop.trf.xlu0
        %vm404 = vcmask 64512
        %v406 = vsel %vm404, %v388, 0
        %408 = vmatpush.msra.mxu0 0.0
        %409 = vmatpush.msra.mxu0 0.0
        %410 = vmatpush.msra.mxu0 0.0
        %411 = vmatpush.msra.mxu0 0.0
        %412 = vmatpush.msra.mxu0 0.0
        %413 = vmatpush.msra.mxu0 0.0
        %414 = vmatpush.msra.mxu0 0.0
        %415 = vmatpush.msra.mxu0 0.0
        %416 = vmatpush.msra.mxu0 0.0
        %417 = vmatpush.msra.mxu0 0.0
        %418 = vmatpush.msra.mxu0 0.0
        %419 = vmatpush.msra.mxu0 0.0
        %420 = vmatpush.msra.mxu0 0.0
        %421 = vmatpush.msra.mxu0 0.0
        %422 = vmatpush.msra.mxu0 0.0
        %423 = vmatpush.msra.mxu0 %v369
        %424 = vmatmul.f32.gmra.mxu0 %v406
        %v425 = vpop.f32.mrf.mxu0
        %v426 = vadd.f32 0.0, %v425
        %427 = vdwg.mxu0
        %v428 = vadd.f32 %v370, %v426
        %429 = vst [vmem:[#allocation2] sm:$0x3] %v428
        %p430 = scmp.eq.s32.totalorder %s20, 3
        // Predicated region
        $region57: #{tpu_custom_call.1} parent=47 // pred_check
          %p431 = pneg %p430
        $region58: #{tpu_custom_call.1} parent=47 // pred_check_branch
          %433 = sbr.rel (%p431) target = $region60
        $region59: #{tpu_custom_call.1} parent=47 // pred_region
          %v434 = vld [vmem:[#allocation2] sm:$0x3]
          %v435 = vld [vmem:[#allocation3] sm:$0xff]
          %v436 = vld [vmem:[#allocation3 + $0x8] sm:$0xff]
          %v437 = vld [vmem:[#allocation3 + $0x10] sm:$0xff]
          %v438 = vld [vmem:[#allocation3 + $0x18] sm:$0xff]
          %v439 = vld [vmem:[#allocation3 + $0x20] sm:$0xff]
          %v440 = vld [vmem:[#allocation3 + $0x28] sm:$0xff]
          %v441 = vld [vmem:[#allocation3 + $0x30] sm:$0xff]
          %v442 = vld [vmem:[#allocation3 + $0x38] sm:$0xff]
          %v443 = vld [vmem:[#allocation3 + $0x40] sm:$0xff]
          %v444 = vld [vmem:[#allocation3 + $0x48] sm:$0xff]
          %v445 = vld [vmem:[#allocation3 + $0x50] sm:$0xff]
          %v446 = vld [vmem:[#allocation3 + $0x58] sm:$0xff]
          %v447 = vld [vmem:[#allocation3 + $0x60] sm:$0xff]
          %v448 = vld [vmem:[#allocation3 + $0x68] sm:$0xff]
          %v449 = vld [vmem:[#allocation3 + $0x70] sm:$0xff]
          %v450 = vld [vmem:[#allocation3 + $0x78] sm:$0xff]
          %v451 = vld [vmem:[%s6] sm:$0x1]
          %v453 = vperm.slane %v451, 0
          %455 = vmatpush.msra.mxu0 %v450
          %456 = vmatpush.msra.mxu0 %v449
          %457 = vmatpush.msra.mxu0 %v448
          %458 = vmatpush.msra.mxu0 %v447
          %459 = vmatpush.msra.mxu0 %v446
          %460 = vmatpush.msra.mxu0 %v445
          %461 = vmatpush.msra.mxu0 %v444
          %462 = vmatpush.msra.mxu0 %v443
          %463 = vmatpush.msra.mxu0 %v442
          %464 = vmatpush.msra.mxu0 %v441
          %465 = vmatpush.msra.mxu0 %v440
          %466 = vmatpush.msra.mxu0 %v439
          %467 = vmatpush.msra.mxu0 %v438
          %468 = vmatpush.msra.mxu0 %v437
          %469 = vmatpush.msra.mxu0 %v436
          %470 = vmatpush.msra.mxu0 %v435
          %471 = vmatmul.f32.gmra.mxu0 %v434
          %v472 = vpop.f32.mrf.mxu0
          %v473 = vadd.f32 %v453, %v472
          %474 = vdwg.mxu0
          %475 = vst [vmem:[#allocation6] sm:$0x3] %v473
        $region60: #{tpu_custom_call.1} parent=47 // pred_fallthru
          _
        // Predicated region
        $region61: #{tpu_custom_call.1} parent=47 // pred_check
          %p476 = pneg %p190
        $region62: #{tpu_custom_call.1} parent=47 // pred_check_branch
          %478 = sbr.rel (%p476) target = $region64
        $region63: #{tpu_custom_call.1} parent=47 // pred_region
          %480 = vsyncadd [#allocation5], 0
          %s482 = sshll.u32 [#allocation6], 4
          %s483 = int_to_ptr.vmem [resolvable:$true] %s482
          %s484 = sshll.u32 %s7, 4
          %s485 = int_to_ptr.hbm [resolvable:$true] %s484
          %487 = dma.vmem_to_hbm [thread:$0]  %s483, 32, %s485, [#allocation5]
        $region64: #{tpu_custom_call.1} parent=47 // pred_fallthru
          _
        // Predicated region
        $region65: #{tpu_custom_call.1} parent=47 // pred_check
          %p488 = pneg %p190
        $region66: #{tpu_custom_call.1} parent=47 // pred_check_branch
          %490 = sbr.rel (%p488) target = $region68
        $region67: #{tpu_custom_call.1} parent=47 // pred_region
          %492 = dma.done [#allocation5], 32
        $region68: #{tpu_custom_call.1} parent=47 // pred_fallthru
          _
      $region48: #{tpu_custom_call.1} parent=5 // pred_fallthru
        _
      %p493 = scmp.le.s32.totalorder 2, %s15
      // Predicated region
      $region69: #{tpu_custom_call.1} parent=5 // pred_check
        %p494 = pneg %p493
      $region70: #{tpu_custom_call.1} parent=5 // pred_check_branch
        %496 = sbr.rel (%p494) target = $region72
      $region71: #{tpu_custom_call.1} parent=5 // pred_region
        %s497 = ssub.s32 %s15, 2
      $region72: #{tpu_custom_call.1} parent=5 // pred_fallthru
        _
    $region6: #{tpu_custom_call.1} parent=1 // loop_footer
      %s19 = sadd.s32 1, %s15
    $region7: #{tpu_custom_call.1} parent=1 // loop_footer_branch
      %14 = sbr.rel target = $region3
    $region8: #{tpu_custom_call.1} parent=1 // loop_exit
      _
    %498 = vsyncpa [#allocation4], 1
    %s499 = scalar_lea.sflag [#allocation4], 1
    %500 = vsyncpa %s499, 1
    %501 = vsyncpa [#allocation5], 1
    %s502 = scalar_lea.sflag [#allocation5], 1
    %503 = vsyncpa %s502, 1

</llo_original>
